<compile_context>
chip_gen: v7x
topology: tpu7x:2x2x1
jax: 0.10.0
libtpu: 0.0.40
codegen_flags: <defaults>
</compile_context>

<pallas_src>
import functools

import jax
import jax.numpy as jnp
from jax.experimental import pallas as pl
from jax.experimental.pallas import tpu as pltpu

BN_EPS = 1e-5
LEAKY_SLOPE = 0.01  # nn.LeakyReLU() default negative_slope


def convblock_kernel(w_ref, cols_ref, params_ref, out_ref, *, m_true):
    # Conv as a single MXU matmul in the transposed (lane-dense) layout:
    #   (Cout, K) @ (K, M) -> (Cout, M), bf16 operands, f32 accumulation.
    conv = jnp.dot(w_ref[...], cols_ref[...], preferred_element_type=jnp.float32)

    # BatchNorm2d (training mode): per-channel batch statistics over M = N*Ho*Wo (lane axis).
    # One-pass stats: sum and sum-of-squares, biased variance (matches PyTorch forward).
    inv_m = 1.0 / float(m_true)
    s = jnp.sum(conv, axis=-1, keepdims=True)            # (Cout, 1)
    ss = jnp.sum(conv * conv, axis=-1, keepdims=True)    # (Cout, 1)
    mean = s * inv_m
    var = ss * inv_m - mean * mean
    inv_std = jax.lax.rsqrt(var + BN_EPS)                # EUP

    gamma = params_ref[:, 0:1]                           # (Cout, 1)
    beta = params_ref[:, 1:2]                            # (Cout, 1)

    # Fused affine: y = conv * a + b  (one mul + one add over the full tile).
    a = inv_std * gamma
    b = beta - mean * a
    y = conv * a + b

    # LeakyReLU(0.01): max(y, 0.01*y) is exact for slope < 1.
    out_ref[...] = jnp.maximum(y, LEAKY_SLOPE * y)


def conv_block_forward(x_nchw, weight, gamma, beta, ksize=3):
    """x_nchw: (N, Cin, H, W); weight: (Cout, Cin, kh, kw); gamma/beta: (Cout,).

    NOTE: the Conv2d bias is intentionally not an argument — under train-mode BatchNorm it is
    cancelled by mean subtraction and has no effect on the output.
    """
    N, Cin, H, W = x_nchw.shape
    Cout = weight.shape[0]
    Ho, Wo = H - ksize + 1, W - ksize + 1
    M = N * Ho * Wo
    K = ksize * ksize * Cin

    # ---- glue (plain JAX): im2col in transposed (K, M) layout, minimal K padding, bf16 cast ----
    # TODO: for large inputs, fuse the im2col into the kernel (9 shifted accumulating matmuls from
    #       a VMEM tile of the raw activation) to remove the remaining kh*kw duplication in HBM.
    x_nhwc = jnp.transpose(x_nchw, (0, 2, 3, 1))                     # NCHW -> NHWC
    patches = []
    for kh in range(ksize):
        for kw in range(ksize):
            patches.append(x_nhwc[:, kh:kh + Ho, kw:kw + Wo, :])     # (N, Ho, Wo, Cin)
    cols = jnp.stack(patches, axis=0)                                # (k*k, N, Ho, Wo, Cin)
    cols_t = jnp.transpose(cols, (0, 4, 1, 2, 3)).reshape(K, M)      # (K, M), K-order (kh, kw, Cin)

    # weight (Cout, Cin, kh, kw) -> (Cout, kh, kw, Cin) -> (Cout, K) to match the cols K-ordering.
    w2 = jnp.transpose(weight, (0, 2, 3, 1)).reshape(Cout, K)

    # Pad K only up to a bf16 sublane multiple (16), not 128 lanes: 36 -> 48.
    K_pad = ((K + 15) // 16) * 16
    cols_t = jnp.pad(cols_t, ((0, K_pad - K), (0, 0))).astype(jnp.bfloat16)
    w2 = jnp.pad(w2, ((0, 0), (0, K_pad - K))).astype(jnp.bfloat16)

    # gamma/beta merged into a single small per-channel parameter block.
    params = jnp.stack([gamma.astype(jnp.float32), beta.astype(jnp.float32)], axis=1)  # (Cout, 2)

    # ---- hot path: single Pallas kernel (matmul + BN reduction + activation), lane-dense output ----
    out_t = pl.pallas_call(
        functools.partial(convblock_kernel, m_true=M),
        out_shape=jax.ShapeDtypeStruct((Cout, M), jnp.float32),
        grid=(1,),
        in_specs=[
            pl.BlockSpec((Cout, K_pad), lambda i: (0, 0)),
            pl.BlockSpec((K_pad, M), lambda i: (0, 0)),
            pl.BlockSpec((Cout, 2), lambda i: (0, 0)),
        ],
        out_specs=pl.BlockSpec((Cout, M), lambda i: (0, 0)),
        compiler_params=pltpu.CompilerParams(
            dimension_semantics=("arbitrary",)),
    )(w2, cols_t, params)

    # (Cout, M) -> (Cout, N, Ho, Wo) -> NCHW
    out = out_t.reshape(Cout, N, Ho, Wo)
    return jnp.transpose(out, (1, 0, 2, 3))


if __name__ == "__main__":
    # Small shapes consistent with the module: batch=2, in_chan=4, out_chan=8, 16x16 spatial.
    N, Cin, H, W = 2, 4, 16, 16
    Cout, ksize = 8, 3

    key = jax.random.PRNGKey(0)
    kx, kw_key = jax.random.split(key, 2)

    x = jax.random.normal(kx, (N, Cin, H, W), dtype=jnp.float32)

    # Deterministic parameter init (shapes match nn.Conv2d / nn.BatchNorm2d defaults).
    # The Conv2d bias is omitted: it is mathematically cancelled by train-mode BatchNorm.
    fan_in = Cin * ksize * ksize
    bound = 1.0 / jnp.sqrt(jnp.float32(fan_in))
    weight = jax.random.uniform(kw_key, (Cout, Cin, ksize, ksize),
                                minval=-bound, maxval=bound, dtype=jnp.float32)
    gamma = jnp.ones((Cout,), jnp.float32)   # BatchNorm2d default weight
    beta = jnp.zeros((Cout,), jnp.float32)   # BatchNorm2d default bias

    out = conv_block_forward(x, weight, gamma, beta, ksize=ksize)
    jax.block_until_ready(out)
    assert out.shape == (N, Cout, H - ksize + 1, W - ksize + 1)
    print("KERNEL_OK")
</pallas_src>

<mosaic_0001>
module attributes {stable_mosaic.version = 11 : i64} {
  func.func @convblock_kernel(%arg0: i32, %arg1: memref<8x48xbf16, #tpu.memory_space<vmem>>, %arg2: memref<48x392xbf16, #tpu.memory_space<vmem>>, %arg3: memref<8x2xf32, #tpu.memory_space<vmem>>, %arg4: memref<8x392xf32, #tpu.memory_space<vmem>>) attributes {dimension_semantics = [#tpu.dimension_semantics<arbitrary>], iteration_bounds = array<i64: 1>, scalar_prefetch = 0 : i64, scratch_operands = 0 : i64, tpu.core_type = #tpu.core_type<tc>, window_params = [{pipeline_mode = #tpu.pipeline_mode<synchronous>, transform_indices = @transform_0, window_bounds = array<i64: 8, 48>}, {pipeline_mode = #tpu.pipeline_mode<synchronous>, transform_indices = @transform_1, window_bounds = array<i64: 48, 392>}, {pipeline_mode = #tpu.pipeline_mode<synchronous>, transform_indices = @transform_2, window_bounds = array<i64: 8, 2>}, {pipeline_mode = #tpu.pipeline_mode<synchronous>, transform_indices = @transform_3, window_bounds = array<i64: 8, 392>}]} {
    %c0 = arith.constant 0 : index
    %c0_0 = arith.constant 0 : index
    %0 = vector.load %arg1[%c0, %c0_0] : memref<8x48xbf16, #tpu.memory_space<vmem>>, vector<8x48xbf16>
    %c0_1 = arith.constant 0 : index
    %c0_2 = arith.constant 0 : index
    %1 = vector.load %arg2[%c0_1, %c0_2] : memref<48x392xbf16, #tpu.memory_space<vmem>>, vector<48x392xbf16>
    %cst = arith.constant dense<0.000000e+00> : vector<8x392xf32>
    %2 = tpu.matmul %0, %1, %cst {dimension_numbers = #tpu.dot_dimension_numbers<[1], [0], [0], [1], [0, 0, 1, 1], [], []>} : vector<8x48xbf16>, vector<48x392xbf16>, vector<8x392xf32> -> vector<8x392xf32>
    %cst_3 = arith.constant dense<0.000000e+00> : vector<8xf32>
    %3 = vector.multi_reduction <add>, %2, %cst_3 [1] : vector<8x392xf32> to vector<8xf32>
    %4 = vector.shape_cast %3 : vector<8xf32> to vector<8x1xf32>
    %5 = arith.mulf %2, %2 : vector<8x392xf32>
    %cst_4 = arith.constant dense<0.000000e+00> : vector<8xf32>
    %6 = vector.multi_reduction <add>, %5, %cst_4 [1] : vector<8x392xf32> to vector<8xf32>
    %7 = vector.shape_cast %6 : vector<8xf32> to vector<8x1xf32>
    %cst_5 = arith.constant 0.00255102036 : f32
    %8 = vector.broadcast %cst_5 : f32 to vector<8x1xf32>
    %9 = arith.mulf %4, %8 : vector<8x1xf32>
    %cst_6 = arith.constant 0.00255102036 : f32
    %10 = vector.broadcast %cst_6 : f32 to vector<8x1xf32>
    %11 = arith.mulf %7, %10 : vector<8x1xf32>
    %12 = arith.mulf %9, %9 : vector<8x1xf32>
    %13 = arith.subf %11, %12 : vector<8x1xf32>
    %cst_7 = arith.constant 9.99999974E-6 : f32
    %14 = vector.broadcast %cst_7 : f32 to vector<8x1xf32>
    %15 = arith.addf %13, %14 : vector<8x1xf32>
    %16 = math.rsqrt %15 : vector<8x1xf32>
    %c0_8 = arith.constant 0 : index
    %c0_9 = arith.constant 0 : index
    %17 = vector.load %arg3[%c0_8, %c0_9] : memref<8x2xf32, #tpu.memory_space<vmem>>, vector<8x1xf32>
    %c0_10 = arith.constant 0 : index
    %c1 = arith.constant 1 : index
    %18 = vector.load %arg3[%c0_10, %c1] : memref<8x2xf32, #tpu.memory_space<vmem>>, vector<8x1xf32>
    %19 = arith.mulf %16, %17 : vector<8x1xf32>
    %20 = arith.mulf %9, %19 : vector<8x1xf32>
    %21 = arith.subf %18, %20 : vector<8x1xf32>
    %22 = vector.broadcast %19 : vector<8x1xf32> to vector<8x392xf32>
    %23 = arith.mulf %2, %22 : vector<8x392xf32>
    %24 = vector.broadcast %21 : vector<8x1xf32> to vector<8x392xf32>
    %25 = arith.addf %23, %24 : vector<8x392xf32>
    %cst_11 = arith.constant 0.00999999977 : f32
    %26 = vector.broadcast %cst_11 : f32 to vector<8x392xf32>
    %27 = arith.mulf %26, %25 : vector<8x392xf32>
    %28 = arith.maximumf %25, %27 : vector<8x392xf32>
    %c0_12 = arith.constant 0 : index
    %c0_13 = arith.constant 0 : index
    %29 = vector.load %arg4[%c0_12, %c0_13] : memref<8x392xf32, #tpu.memory_space<vmem>>, vector<8x392xf32>
    tpu.vector_store %arg4[%c0_12, %c0_13], %28 {strides = array<i32>} : memref<8x392xf32, #tpu.memory_space<vmem>>, vector<8x392xf32>,
    return
  }
  func.func @transform_0(%arg0: i32) -> (i32, i32) {
    %c0_i32 = arith.constant 0 : i32
    %c0_i32_0 = arith.constant 0 : i32
    %c0_i32_1 = arith.constant 0 : i32
    return %c0_i32, %c0_i32_0 : i32, i32
  }
  func.func @transform_1(%arg0: i32) -> (i32, i32) {
    %c0_i32 = arith.constant 0 : i32
    %c0_i32_0 = arith.constant 0 : i32
    %c0_i32_1 = arith.constant 0 : i32
    return %c0_i32, %c0_i32_0 : i32, i32
  }
  func.func @transform_2(%arg0: i32) -> (i32, i32) {
    %c0_i32 = arith.constant 0 : i32
    %c0_i32_0 = arith.constant 0 : i32
    %c0_i32_1 = arith.constant 0 : i32
    return %c0_i32, %c0_i32_0 : i32, i32
  }
  func.func @transform_3(%arg0: i32) -> (i32, i32) {
    %c0_i32 = arith.constant 0 : i32
    %c0_i32_0 = arith.constant 0 : i32
    %c0_i32_1 = arith.constant 0 : i32
    return %c0_i32, %c0_i32_0 : i32, i32
  }
}

</mosaic_0001>

<llo_original>
// kernel: tpu_custom_call.1
$region0: #{tpu_custom_call.1}
  #allocation0 [shape = 'u32[]', space=smem, size = 0x4, offset = 0x4, fixed_abs, tag = 'smem constant byte address 0x4 - core index']
  #allocation1 [shape = 'u32[144,128]{1,0:T(1,128)}', space=vmem, size = 0x12000, scoped, tag = 'internal scratch']
  %s0 = inlined_call_operand.vmem [shape: bf16[8,48], index: 0, kind: input, shape index: {}]
  %s1 = inlined_call_operand.hbm [shape: bf16[48,392], index: 1, kind: input, shape index: {}]
  %s2 = inlined_call_operand.vmem [shape: f32[8,2], index: 2, kind: input, shape index: {}]
  %s3 = inlined_call_operand.hbm [shape: f32[8,392], index: 3, kind: output, shape index: {}]
  %s4 = sld [smem:[#allocation0]]
  $region26: #{tpu_custom_call.1} parent=0
    _
  %s6 = ssub.s32 1, %s4
  %s7 = scalar_select 0, %s6, %s4
  $region1: #{tpu_custom_call.1} parent=0
    #allocation2 [shape = 'u8[49152]{0}', space=vmem, size = 0xc000, scoped, tag = 'input window, operand 1, single buffered']
    #allocation3 [shape = 's32[1]{0}', space=sflag, size = 0x4, scoped, tag = 'scoped memory for tpu_custom_call.1']
    #allocation4 [shape = 's32[1]{0}', space=sflag, size = 0x4, scoped, tag = 'scoped memory for tpu_custom_call.1']
    #allocation5 [shape = 'u8[16384]{0}', space=vmem, size = 0x4000, scoped, tag = 'output window, operand 0, single buffered']
    %8 = vsyncpa [#allocation3], 0
    %9 = vsyncpa [#allocation4], 0
    // Predicated region
    $region2: #{tpu_custom_call.1} parent=1 // pred_check
      _
    $region3: #{tpu_custom_call.1} parent=1 // pred_check_branch
      %11 = sbr.rel (0) target = $region5
    $region4: #{tpu_custom_call.1} parent=1 // pred_region
      _
    $region5: #{tpu_custom_call.1} parent=1 // pred_fallthru
      _
    // Predicated region
    $region6: #{tpu_custom_call.1} parent=1 // pred_check
      _
    $region7: #{tpu_custom_call.1} parent=1 // pred_check_branch
      %13 = sbr.rel (0) target = $region9
    $region8: #{tpu_custom_call.1} parent=1 // pred_region
      %s15 = ssub.s32 1536, 1536
      %16 = vsyncadd [#allocation3], %s15
      %s17 = sshll.u32 [#allocation2], 4
      %s18 = int_to_ptr.vmem [resolvable:$true] %s17
      %23 = dma.hbm_to_vmem [thread:$0]  %s1, 1536, %s18, [#allocation3], 256, 256, 16
    $region9: #{tpu_custom_call.1} parent=1 // pred_fallthru
      _
    // Predicated region
    $region10: #{tpu_custom_call.1} parent=1 // pred_check
      _
    $region11: #{tpu_custom_call.1} parent=1 // pred_check_branch
      %25 = sbr.rel (0) target = $region13
    $region12: #{tpu_custom_call.1} parent=1 // pred_region
      _
    $region13: #{tpu_custom_call.1} parent=1 // pred_fallthru
      _
    // Predicated region
    $region14: #{tpu_custom_call.1} parent=1 // pred_check
      _
    $region15: #{tpu_custom_call.1} parent=1 // pred_check_branch
      %27 = sbr.rel (0) target = $region17
    $region16: #{tpu_custom_call.1} parent=1 // pred_region
      %28 = dma.done [#allocation3], 1536
    $region17: #{tpu_custom_call.1} parent=1 // pred_fallthru
      _
    %v30 = vld [vmem:[%s0] sm:$0xf]
    %v31 = vld [vmem:[#allocation2] sm:$0xff]
    %v32 = vld [vmem:[#allocation2 + $0x8] sm:$0xff]
    %v33 = vld [vmem:[#allocation2 + $0x10] sm:$0xff]
    %v34 = vld [vmem:[#allocation2 + $0x18] sm:$0xff]
    %v35 = vld [vmem:[#allocation2 + $0x20] sm:$0xff]
    %v36 = vld [vmem:[#allocation2 + $0x28] sm:$0xff]
    %v37 = vld [vmem:[#allocation2 + $0x30] sm:$0xff]
    %v38 = vld [vmem:[#allocation2 + $0x38] sm:$0xff]
    %v39 = vld [vmem:[#allocation2 + $0x40] sm:$0xff]
    %v40 = vld [vmem:[#allocation2 + $0x48] sm:$0xff]
    %v41 = vld [vmem:[#allocation2 + $0x50] sm:$0xff]
    %v42 = vld [vmem:[#allocation2 + $0x58] sm:$0xff]
    %v55 = vunpack.c.l.b16 %v31
    %v56 = vunpack.c.h.b16 %v31
    %v57 = vunpack.c.l.b16 %v32
    %v58 = vunpack.c.h.b16 %v32
    %v59 = vunpack.c.l.b16 %v33
    %v60 = vunpack.c.h.b16 %v33
    %v61 = vunpack.c.l.b16 %v34
    %v62 = vunpack.c.h.b16 %v34
    %v63 = vunpack.c.l.b16 %v35
    %v64 = vunpack.c.h.b16 %v35
    %v65 = vunpack.c.l.b16 %v36
    %v66 = vunpack.c.h.b16 %v36
    %v67 = vunpack.c.l.b16 %v37
    %v68 = vunpack.c.h.b16 %v37
    %v69 = vunpack.c.l.b16 %v38
    %v70 = vunpack.c.h.b16 %v38
    %v71 = vunpack.c.l.b16 %v39
    %v72 = vunpack.c.h.b16 %v39
    %v73 = vunpack.c.l.b16 %v40
    %v74 = vunpack.c.h.b16 %v40
    %v75 = vunpack.c.l.b16 %v41
    %v76 = vunpack.c.h.b16 %v41
    %v77 = vunpack.c.l.b16 %v42
    %v78 = vunpack.c.h.b16 %v42
    %v79 = vpack.c.b16 %v59, %v55
    %v80 = vpack.c.b16 %v60, %v56
    %v81 = vpack.c.b16 %v61, %v57
    %v82 = vpack.c.b16 %v62, %v58
    %v83 = vpack.c.b16 %v67, %v63
    %v84 = vpack.c.b16 %v68, %v64
    %v85 = vpack.c.b16 %v69, %v65
    %v86 = vpack.c.b16 %v70, %v66
    %v87 = vpack.c.b16 %v75, %v71
    %v88 = vpack.c.b16 %v76, %v72
    %v89 = vpack.c.b16 %v77, %v73
    %v90 = vpack.c.b16 %v78, %v74
    %vm103 = vcmask 392192
    %v105 = vsel %vm103, %v30, 0
    %107 = vmatprep.subr.bf16.mxu0 %v80
    %108 = vmatpush1.bf16.msra.mxu0 %v79
    %109 = vmatprep.subr.bf16.mxu0 %v84
    %110 = vmatpush1.bf16.msra.mxu0 %v83
    %111 = vmatprep.subr.bf16.mxu0 %v88
    %112 = vmatpush1.bf16.msra.mxu0 %v87
    %113 = vmatprep.subr.bf16.mxu0 0
    %114 = vmatpush1.bf16.msra.mxu0 0
    %115 = vmatprep.subr.bf16.mxu0 0
    %116 = vmatpush1.bf16.msra.mxu0 0
    %117 = vmatprep.subr.bf16.mxu0 0
    %118 = vmatpush1.bf16.msra.mxu0 0
    %119 = vmatprep.subr.bf16.mxu0 0
    %120 = vmatpush1.bf16.msra.mxu0 0
    %121 = vmatprep.subr.bf16.mxu0 0
    %122 = vmatpush1.bf16.msra.mxu0 0
    %123 = vmatprep.subr.bf16.mxu0 0
    %124 = vmatpush1.bf16.msra.mxu0 0
    %125 = vmatprep.subr.bf16.mxu0 0
    %126 = vmatpush1.bf16.msra.mxu0 0
    %127 = vmatprep.subr.bf16.mxu0 0
    %128 = vmatpush1.bf16.msra.mxu0 0
    %129 = vmatprep.subr.bf16.mxu0 0
    %130 = vmatpush1.bf16.msra.mxu0 0
    %131 = vmatprep.subr.bf16.mxu0 0
    %132 = vmatpush1.bf16.msra.mxu0 0
    %133 = vmatprep.subr.bf16.mxu0 0
    %134 = vmatpush1.bf16.msra.mxu0 0
    %135 = vmatprep.subr.bf16.mxu0 0
    %136 = vmatpush1.bf16.msra.mxu0 0
    %137 = vmatprep.subr.bf16.mxu0 0
    %138 = vmatpush1.bf16.msra.mxu0 0
    %139 = vmatprep.mubr.bf16.mxu0 0
    %140 = vmatmul.mubr.bf16.gmra.mrb[0].mxu0 %v105
    %v141 = vpop.f32.mrb[0].mxu0
    %v142 = vadd.f32 0.0, %v141
    %v143 = vpop.f32.mrb[0].mxu0
    %v144 = vadd.f32 0.0, %v143
    %v145 = vpop.f32.mrb[0].mxu0
    %v146 = vpop.f32.mrb[0].mxu0
    %147 = vdwg.mxu0
    %148 = vmatprep.subr.bf16.mxu0 %v82
    %149 = vmatpush1.bf16.msra.mxu0 %v81
    %150 = vmatprep.subr.bf16.mxu0 %v86
    %151 = vmatpush1.bf16.msra.mxu0 %v85
    %152 = vmatprep.subr.bf16.mxu0 %v90
    %153 = vmatpush1.bf16.msra.mxu0 %v89
    %154 = vmatprep.subr.bf16.mxu0 0
    %155 = vmatpush1.bf16.msra.mxu0 0
    %156 = vmatprep.subr.bf16.mxu0 0
    %157 = vmatpush1.bf16.msra.mxu0 0
    %158 = vmatprep.subr.bf16.mxu0 0
    %159 = vmatpush1.bf16.msra.mxu0 0
    %160 = vmatprep.subr.bf16.mxu0 0
    %161 = vmatpush1.bf16.msra.mxu0 0
    %162 = vmatprep.subr.bf16.mxu0 0
    %163 = vmatpush1.bf16.msra.mxu0 0
    %164 = vmatprep.subr.bf16.mxu0 0
    %165 = vmatpush1.bf16.msra.mxu0 0
    %166 = vmatprep.subr.bf16.mxu0 0
    %167 = vmatpush1.bf16.msra.mxu0 0
    %168 = vmatprep.subr.bf16.mxu0 0
    %169 = vmatpush1.bf16.msra.mxu0 0
    %170 = vmatprep.subr.bf16.mxu0 0
    %171 = vmatpush1.bf16.msra.mxu0 0
    %172 = vmatprep.subr.bf16.mxu0 0
    %173 = vmatpush1.bf16.msra.mxu0 0
    %174 = vmatprep.subr.bf16.mxu0 0
    %175 = vmatpush1.bf16.msra.mxu0 0
    %176 = vmatprep.subr.bf16.mxu0 0
    %177 = vmatpush1.bf16.msra.mxu0 0
    %178 = vmatprep.subr.bf16.mxu0 0
    %179 = vmatpush1.bf16.msra.mxu0 0
    %180 = vmatprep.mubr.bf16.mxu0 0
    %181 = vmatmul.mubr.bf16.gmra.mrb[0].mxu0 %v105
    %v182 = vpop.f32.mrb[0].mxu0
    %v183 = vadd.f32 0.0, %v182
    %v184 = vpop.f32.mrb[0].mxu0
    %v185 = vadd.f32 0.0, %v184
    %v186 = vpop.f32.mrb[0].mxu0
    %v187 = vpop.f32.mrb[0].mxu0
    %188 = vdwg.mxu0
    %v189 = vadd.f32 %v142, %v144
    %v190 = vadd.f32 %v189, %v183
    %vm191 = vcmask 64512
    %v192 = vsel %vm191, %v185, 0.0
    %v193 = vadd.f32 %v190, %v192
    %194 = vadd.xlane.f32.xlu0 %v193
    %v195 = vpop.xlane.xlu0 %194
    %v196 = vmul.f32 %v142, %v142
    %v197 = vmul.f32 %v144, %v144
    %v198 = vmul.f32 %v183, %v183
    %v199 = vmul.f32 %v185, %v185
    %v200 = vadd.f32 %v196, %v197
    %v201 = vadd.f32 %v200, %v198
    %v202 = vsel %vm191, %v199, 0.0
    %v203 = vadd.f32 %v201, %v202
    %204 = vadd.xlane.f32.xlu0 %v203
    %v205 = vpop.xlane.xlu0 %204
    %v206 = vmul.f32 %v195, 0.0025510204
    %v207 = vmul.f32 %v205, 0.0025510204
    %v208 = vmul.f32 %v206, %v206
    %v209 = vsub.f32 %v207, %v208
    %v210 = vadd.f32 %v209, 1e-05
    %v211 = vrsqrt.pop %v210
    %v212 = vld [vmem:[%s2] sm:$0xff]
    %v213 = vmul.f32 %v211, %v212
    %v214 = vmul.f32 %v206, %v213
    %216 = vrot.lane.b32.xlu0 %v214, 1
    %v217 = vpop.permute.xlu0 %216
    %v219 = vsub.f32 %v212, %v217
    %221 = vset.pattern.permute.xlu0 0
    %222 = vperm.xlu0 %221, %v213
    %v223 = vpop.permute.xlu0 %222
    %v225 = vmul.f32 %v142, %v223
    %v226 = vmul.f32 %v144, %v223
    %v227 = vmul.f32 %v183, %v223
    %v228 = vmul.f32 %v185, %v223
    %230 = vset.pattern.permute.xlu0 1
    %231 = vperm.xlu0 %230, %v219
    %v232 = vpop.permute.xlu0 %231
    %v234 = vadd.f32 %v225, %v232
    %v235 = vadd.f32 %v226, %v232
    %v236 = vadd.f32 %v227, %v232
    %v237 = vadd.f32 %v228, %v232
    %v238 = vmul.f32 %v234, 0.01
    %v239 = vmul.f32 %v235, 0.01
    %v240 = vmul.f32 %v236, 0.01
    %v241 = vmul.f32 %v237, 0.01
    %v242 = vmax.f32 %v234, %v238
    %v243 = vmax.f32 %v235, %v239
    %v244 = vmax.f32 %v236, %v240
    %v245 = vmax.f32 %v237, %v241
    %246 = vst [vmem:[#allocation5] sm:$0xff] %v242
    %247 = vst [vmem:[#allocation5 + $0x8] sm:$0xff] %v243
    %248 = vst [vmem:[#allocation5 + $0x10] sm:$0xff] %v244
    %249 = vst.msk [vmem:[#allocation5 + $0x18] sm:$0xff] %vm191, %v245
    // Predicated region
    $region18: #{tpu_custom_call.1} parent=1 // pred_check
      _
    $region19: #{tpu_custom_call.1} parent=1 // pred_check_branch
      %251 = sbr.rel (0) target = $region21
    $region20: #{tpu_custom_call.1} parent=1 // pred_region
      %s253 = ssub.s32 512, 512
      %254 = vsyncadd [#allocation4], %s253
      %s256 = sshll.u32 [#allocation5], 4
      %s257 = int_to_ptr.vmem [resolvable:$true] %s256
      %259 = dma.vmem_to_hbm [thread:$0]  %s257, 512, %s3, [#allocation4]
    $region21: #{tpu_custom_call.1} parent=1 // pred_fallthru
      _
    // Predicated region
    $region22: #{tpu_custom_call.1} parent=1 // pred_check
      _
    $region23: #{tpu_custom_call.1} parent=1 // pred_check_branch
      %261 = sbr.rel (0) target = $region25
    $region24: #{tpu_custom_call.1} parent=1 // pred_region
      %262 = dma.done [#allocation4], 512
    $region25: #{tpu_custom_call.1} parent=1 // pred_fallthru
      _
    %263 = vsyncpa [#allocation3], 1
    %264 = vsyncpa [#allocation4], 1

</llo_original>
